<compile_context>
chip_gen: v7x
topology: tpu7x:2x2x1
jax: 0.10.0
libtpu: 0.0.40
codegen_flags: <defaults>
</compile_context>

<pallas_src>
import math

import jax
import jax.numpy as jnp
from jax.experimental import pallas as pl
from jax.experimental.pallas import tpu as pltpu

_LANE = 128


def _round_up(v, m):
    return (v + m - 1) // m * m


def _xw_kernel(x_ref, w_ref, h_ref):
    # h tile = x tile @ W.  W is (Fin_p, Fout_p), already in matmul orientation,
    # and resident across the row grid (constant index_map).
    h_ref[...] = jnp.dot(
        x_ref[...], w_ref[...], preferred_element_type=jnp.float32
    ).astype(h_ref.dtype)


def _adj_h_kernel(adj_ref, h_ref, b_ref, out_ref):
    # out[i] = sum_k adj[i, k] @ h[k] + bias.
    # The output block (i, 0) is resident across the inner k axis, so accumulate
    # in place (f32) and fold the bias into the accumulator initialization.
    k = pl.program_id(1)

    @pl.when(k == 0)
    def _():
        out_ref[...] = jnp.broadcast_to(b_ref[...], out_ref.shape)

    out_ref[...] += jnp.dot(
        adj_ref[...], h_ref[...], preferred_element_type=jnp.float32
    )


def graph_conv(x, adj, weight, bias=None, *, blk_i=512, blk_k=512,
               matmul_dtype=jnp.bfloat16):
    """GraphConv forward: adj @ (x @ weight) + bias.

    x: (N, Fin), adj: (N, N), weight: (Fin, Fout), bias: (1, Fout) or None.

    blk_i / blk_k: row block and contraction block for the adj contraction
    (clamped and forced to multiples of 128).  matmul_dtype: operand dtype for
    the adj contraction and the stored h (bf16 default, f32 for exact
    PyTorch numerics); accumulation is always f32.
    """
    n, fin = x.shape
    fout = weight.shape[1]

    # Lane-dense padding: feature dims to multiples of 128.
    fin_p = _round_up(fin, _LANE)
    fout_p = _round_up(fout, _LANE)

    # Row / contraction blocks: multiples of 128, clamped for small graphs.
    n_min = _round_up(n, _LANE)
    blk_i = min(_round_up(max(blk_i, _LANE), _LANE), n_min)
    blk_k = min(_round_up(max(blk_k, _LANE), _LANE), n_min)
    n_p = _round_up(n, math.lcm(blk_i, blk_k))

    # x / W: small; pad to lane-dense shapes in f32 (x @ W runs f32 -> f32 acc,
    # then h is stored in matmul_dtype).
    x_p = jnp.pad(x.astype(jnp.float32), ((0, n_p - n), (0, fin_p - fin)))
    w_p = jnp.pad(weight.astype(jnp.float32), ((0, fin_p - fin), (0, fout_p - fout)))

    # adj: cast FIRST (halves the wrapper pass at bf16), pad only if needed.
    adj_c = adj if adj.dtype == matmul_dtype else adj.astype(matmul_dtype)
    if n_p != n:
        adj_c = jnp.pad(adj_c, ((0, n_p - n), (0, n_p - n)))

    if bias is None:
        b_p = jnp.zeros((1, fout_p), jnp.float32)
    else:
        b_p = jnp.pad(
            bias.reshape(1, fout).astype(jnp.float32), ((0, 0), (0, fout_p - fout))
        )

    # Kernel 1: h = x @ W, large row block, W resident; "parallel" so v7x's two
    # TensorCores split rows.  h is written in matmul_dtype so kernel 2 streams
    # the narrower dtype.
    h = pl.pallas_call(
        _xw_kernel,
        out_shape=jax.ShapeDtypeStruct((n_p, fout_p), matmul_dtype),
        grid_spec=pltpu.PrefetchScalarGridSpec(
            num_scalar_prefetch=0,
            grid=(n_p // blk_i,),
            in_specs=[
                pl.BlockSpec((blk_i, fin_p), lambda i: (i, 0)),
                pl.BlockSpec((fin_p, fout_p), lambda i: (0, 0)),
            ],
            out_specs=pl.BlockSpec((blk_i, fout_p), lambda i: (i, 0)),
        ),
        compiler_params=pltpu.CompilerParams(dimension_semantics=("parallel",)),
    )(x_p, w_p)

    # Kernel 2: out = adj @ h + bias.  adj streamed as (blk_i, blk_k) tiles, the
    # node contraction is the trailing "arbitrary" axis, f32 accumulation in the
    # resident (blk_i, Fout_p) output block, bias folded into the init.
    out = pl.pallas_call(
        _adj_h_kernel,
        out_shape=jax.ShapeDtypeStruct((n_p, fout_p), jnp.float32),
        grid_spec=pltpu.PrefetchScalarGridSpec(
            num_scalar_prefetch=0,
            grid=(n_p // blk_i, n_p // blk_k),
            in_specs=[
                pl.BlockSpec((blk_i, blk_k), lambda i, k: (i, k)),
                pl.BlockSpec((blk_k, fout_p), lambda i, k: (k, 0)),
                pl.BlockSpec((1, fout_p), lambda i, k: (0, 0)),
            ],
            out_specs=pl.BlockSpec((blk_i, fout_p), lambda i, k: (i, 0)),
        ),
        compiler_params=pltpu.CompilerParams(
            dimension_semantics=("parallel", "arbitrary")
        ),
    )(adj_c, h, b_p)

    # Padded rows hold only the bias; slice them (and padded feature lanes) off.
    return out[:n, :fout]


if __name__ == "__main__":
    # Small graph: N nodes, Fin input features, Fout output features.
    N, FIN, FOUT = 256, 32, 16

    key = jax.random.PRNGKey(0)
    kx, ka, kw, kb = jax.random.split(key, 4)

    x = jax.random.normal(kx, (N, FIN), dtype=jnp.float32)
    # Symmetric, row-normalized dense "adjacency".
    adj = jax.random.uniform(ka, (N, N), dtype=jnp.float32)
    adj = (adj + adj.T) * 0.5
    adj = adj / jnp.sum(adj, axis=1, keepdims=True)

    # GraphConv.reset_parameters: stdv = 1/sqrt(out_features)
    stdv = 1.0 / (FOUT ** 0.5)
    weight = jax.random.uniform(kw, (FIN, FOUT), minval=-stdv, maxval=stdv,
                                dtype=jnp.float32)
    bias = jax.random.uniform(kb, (1, FOUT), minval=-stdv, maxval=stdv,
                              dtype=jnp.float32)

    hp = jax.lax.Precision.HIGHEST
    ref = jnp.dot(adj, jnp.dot(x, weight, precision=hp), precision=hp) + bias

    # Default fast path: bf16 operands for the (N, N) adj contraction and the
    # stored h, f32 accumulation.  (Looser tolerance: adj and h are each rounded
    # to bf16 once before the contraction.)
    out_bf16 = graph_conv(x, adj, weight, bias)
    jax.block_until_ready(out_bf16)
    assert out_bf16.shape == (N, FOUT)
    assert jnp.allclose(out_bf16, ref, atol=5e-2, rtol=5e-2), \
        float(jnp.max(jnp.abs(out_bf16 - ref)))

    # Faithful f32 path (matches the PyTorch module's numerics).
    out_f32 = graph_conv(x, adj, weight, bias, matmul_dtype=jnp.float32)
    jax.block_until_ready(out_f32)
    assert out_f32.shape == (N, FOUT)
    assert jnp.allclose(out_f32, ref, atol=5e-3, rtol=5e-3), \
        float(jnp.max(jnp.abs(out_f32 - ref)))

    print("KERNEL_OK")
</pallas_src>

<mosaic_0001>
module attributes {stable_mosaic.version = 11 : i64} {
  func.func @_xw_kernel(%arg0: i32, %arg1: memref<256x128xf32, #tpu.memory_space<vmem>>, %arg2: memref<128x128xf32, #tpu.memory_space<vmem>>, %arg3: memref<256x128xbf16, #tpu.memory_space<vmem>>) attributes {dimension_semantics = [#tpu.dimension_semantics<parallel>], iteration_bounds = array<i64: 1>, scalar_prefetch = 0 : i64, scratch_operands = 0 : i64, tpu.core_type = #tpu.core_type<tc>, window_params = [{transform_indices = @transform_0, window_bounds = array<i64: 256, 128>}, {pipeline_mode = #tpu.pipeline_mode<synchronous>, transform_indices = @transform_1, window_bounds = array<i64: 128, 128>}, {transform_indices = @transform_2, window_bounds = array<i64: 256, 128>}]} {
    %c0 = arith.constant 0 : index
    %c0_0 = arith.constant 0 : index
    %0 = vector.load %arg1[%c0, %c0_0] : memref<256x128xf32, #tpu.memory_space<vmem>>, vector<256x128xf32>
    %c0_1 = arith.constant 0 : index
    %c0_2 = arith.constant 0 : index
    %1 = vector.load %arg2[%c0_1, %c0_2] : memref<128x128xf32, #tpu.memory_space<vmem>>, vector<128x128xf32>
    %cst = arith.constant dense<0.000000e+00> : vector<256x128xf32>
    %2 = tpu.matmul %0, %1, %cst {dimension_numbers = #tpu.dot_dimension_numbers<[1], [0], [0], [1], [0, 0, 1, 1], [], []>} : vector<256x128xf32>, vector<128x128xf32>, vector<256x128xf32> -> vector<256x128xf32>
    %3 = arith.truncf %2 : vector<256x128xf32> to vector<256x128xbf16>
    %c0_3 = arith.constant 0 : index
    %c0_4 = arith.constant 0 : index
    %4 = vector.load %arg3[%c0_3, %c0_4] : memref<256x128xbf16, #tpu.memory_space<vmem>>, vector<256x128xbf16>
    tpu.vector_store %arg3[%c0_3, %c0_4], %3 {strides = array<i32>} : memref<256x128xbf16, #tpu.memory_space<vmem>>, vector<256x128xbf16>,
    return
  }
  func.func @transform_0(%arg0: i32) -> (i32, i32) {
    %c0_i32 = arith.constant 0 : i32
    %c0_i32_0 = arith.constant 0 : i32
    return %arg0, %c0_i32 : i32, i32
  }
  func.func @transform_1(%arg0: i32) -> (i32, i32) {
    %c0_i32 = arith.constant 0 : i32
    %c0_i32_0 = arith.constant 0 : i32
    %c0_i32_1 = arith.constant 0 : i32
    return %c0_i32, %c0_i32_0 : i32, i32
  }
  func.func @transform_2(%arg0: i32) -> (i32, i32) {
    %c0_i32 = arith.constant 0 : i32
    %c0_i32_0 = arith.constant 0 : i32
    return %arg0, %c0_i32 : i32, i32
  }
}

</mosaic_0001>

<llo_original>
// kernel: tpu_custom_call.1
$region0: #{tpu_custom_call.1}
  #allocation0 [shape = 'u32[]', space=smem, size = 0x4, offset = 0x4, fixed_abs, tag = 'smem constant byte address 0x4 - core index']
  #allocation1 [shape = 'u32[144,128]{1,0:T(1,128)}', space=vmem, size = 0x12000, scoped, tag = 'internal scratch']
  %s0 = inlined_call_operand.hbm [shape: f32[256,128], index: 0, kind: input, shape index: {}]
  %s1 = inlined_call_operand.hbm [shape: f32[128,128], index: 1, kind: input, shape index: {}]
  %s2 = inlined_call_operand.hbm [shape: bf16[256,128], index: 2, kind: output, shape index: {}]
  %s3 = sld [smem:[#allocation0]]
  $region26: #{tpu_custom_call.1} parent=0
    _
  %s5 = ssub.s32 1, %s3
  %s6 = scalar_select 0, %s5, %s3
  $region1: #{tpu_custom_call.1} parent=0
    #allocation2 [shape = 'u8[131072]{0}', space=vmem, size = 0x20000, scoped, tag = 'input window, operand 0, single buffered']
    #allocation3 [shape = 's32[1]{0}', space=sflag, size = 0x4, scoped, tag = 'scoped memory for tpu_custom_call.1']
    #allocation4 [shape = 's32[1]{0}', space=sflag, size = 0x4, scoped, tag = 'scoped memory for tpu_custom_call.1']
    #allocation5 [shape = 'u8[65536]{0}', space=vmem, size = 0x10000, scoped, tag = 'input window, operand 1, single buffered']
    #allocation6 [shape = 's32[1]{0}', space=sflag, size = 0x4, scoped, tag = 'scoped memory for tpu_custom_call.1']
    #allocation7 [shape = 'u8[65536]{0}', space=vmem, size = 0x10000, scoped, tag = 'output window, operand 0, single buffered']
    %7 = vsyncpa [#allocation3], 0
    %8 = vsyncpa [#allocation6], 0
    %9 = vsyncpa [#allocation4], 0
    // Predicated region
    $region2: #{tpu_custom_call.1} parent=1 // pred_check
      _
    $region3: #{tpu_custom_call.1} parent=1 // pred_check_branch
      %11 = sbr.rel (0) target = $region5
    $region4: #{tpu_custom_call.1} parent=1 // pred_region
      %s13 = ssub.s32 4096, 4096
      %14 = vsyncadd [#allocation3], %s13
      %s15 = sshll.u32 [#allocation2], 4
      %s16 = int_to_ptr.vmem [resolvable:$true] %s15
      %21 = dma.hbm_to_vmem [thread:$0]  %s0, 4096, %s16, [#allocation3], 128, 128, 8
    $region5: #{tpu_custom_call.1} parent=1 // pred_fallthru
      _
    // Predicated region
    $region6: #{tpu_custom_call.1} parent=1 // pred_check
      _
    $region7: #{tpu_custom_call.1} parent=1 // pred_check_branch
      %23 = sbr.rel (0) target = $region9
    $region8: #{tpu_custom_call.1} parent=1 // pred_region
      %s25 = ssub.s32 2048, 2048
      %26 = vsyncadd [#allocation6], %s25
      %s27 = sshll.u32 [#allocation5], 4
      %s28 = int_to_ptr.vmem [resolvable:$true] %s27
      %33 = dma.hbm_to_vmem [thread:$0]  %s1, 2048, %s28, [#allocation6], 128, 128, 8
    $region9: #{tpu_custom_call.1} parent=1 // pred_fallthru
      _
    // Predicated region
    $region10: #{tpu_custom_call.1} parent=1 // pred_check
      _
    $region11: #{tpu_custom_call.1} parent=1 // pred_check_branch
      %35 = sbr.rel (0) target = $region13
    $region12: #{tpu_custom_call.1} parent=1 // pred_region
      %36 = dma.done [#allocation3], 4096
    $region13: #{tpu_custom_call.1} parent=1 // pred_fallthru
      _
    // Predicated region
    $region14: #{tpu_custom_call.1} parent=1 // pred_check
      _
    $region15: #{tpu_custom_call.1} parent=1 // pred_check_branch
      %38 = sbr.rel (0) target = $region17
    $region16: #{tpu_custom_call.1} parent=1 // pred_region
      %39 = dma.done [#allocation6], 2048
    $region17: #{tpu_custom_call.1} parent=1 // pred_fallthru
      _
    %v40 = vld [vmem:[#allocation2] sm:$0xff]
    %v41 = vld [vmem:[#allocation2 + $0x8] sm:$0xff]
    %v42 = vld [vmem:[#allocation2 + $0x10] sm:$0xff]
    %v43 = vld [vmem:[#allocation2 + $0x18] sm:$0xff]
    %v44 = vld [vmem:[#allocation2 + $0x20] sm:$0xff]
    %v45 = vld [vmem:[#allocation2 + $0x28] sm:$0xff]
    %v46 = vld [vmem:[#allocation2 + $0x30] sm:$0xff]
    %v47 = vld [vmem:[#allocation2 + $0x38] sm:$0xff]
    %v48 = vld [vmem:[#allocation2 + $0x40] sm:$0xff]
    %v49 = vld [vmem:[#allocation2 + $0x48] sm:$0xff]
    %v50 = vld [vmem:[#allocation2 + $0x50] sm:$0xff]
    %v51 = vld [vmem:[#allocation2 + $0x58] sm:$0xff]
    %v52 = vld [vmem:[#allocation2 + $0x60] sm:$0xff]
    %v53 = vld [vmem:[#allocation2 + $0x68] sm:$0xff]
    %v54 = vld [vmem:[#allocation2 + $0x70] sm:$0xff]
    %v55 = vld [vmem:[#allocation2 + $0x78] sm:$0xff]
    %v56 = vld [vmem:[#allocation2 + $0x80] sm:$0xff]
    %v57 = vld [vmem:[#allocation2 + $0x88] sm:$0xff]
    %v58 = vld [vmem:[#allocation2 + $0x90] sm:$0xff]
    %v59 = vld [vmem:[#allocation2 + $0x98] sm:$0xff]
    %v60 = vld [vmem:[#allocation2 + $0xa0] sm:$0xff]
    %v61 = vld [vmem:[#allocation2 + $0xa8] sm:$0xff]
    %v62 = vld [vmem:[#allocation2 + $0xb0] sm:$0xff]
    %v63 = vld [vmem:[#allocation2 + $0xb8] sm:$0xff]
    %v64 = vld [vmem:[#allocation2 + $0xc0] sm:$0xff]
    %v65 = vld [vmem:[#allocation2 + $0xc8] sm:$0xff]
    %v66 = vld [vmem:[#allocation2 + $0xd0] sm:$0xff]
    %v67 = vld [vmem:[#allocation2 + $0xd8] sm:$0xff]
    %v68 = vld [vmem:[#allocation2 + $0xe0] sm:$0xff]
    %v69 = vld [vmem:[#allocation2 + $0xe8] sm:$0xff]
    %v70 = vld [vmem:[#allocation2 + $0xf0] sm:$0xff]
    %v71 = vld [vmem:[#allocation2 + $0xf8] sm:$0xff]
    %v72 = vld [vmem:[#allocation5] sm:$0xff]
    %v73 = vld [vmem:[#allocation5 + $0x8] sm:$0xff]
    %v74 = vld [vmem:[#allocation5 + $0x10] sm:$0xff]
    %v75 = vld [vmem:[#allocation5 + $0x18] sm:$0xff]
    %v76 = vld [vmem:[#allocation5 + $0x20] sm:$0xff]
    %v77 = vld [vmem:[#allocation5 + $0x28] sm:$0xff]
    %v78 = vld [vmem:[#allocation5 + $0x30] sm:$0xff]
    %v79 = vld [vmem:[#allocation5 + $0x38] sm:$0xff]
    %v80 = vld [vmem:[#allocation5 + $0x40] sm:$0xff]
    %v81 = vld [vmem:[#allocation5 + $0x48] sm:$0xff]
    %v82 = vld [vmem:[#allocation5 + $0x50] sm:$0xff]
    %v83 = vld [vmem:[#allocation5 + $0x58] sm:$0xff]
    %v84 = vld [vmem:[#allocation5 + $0x60] sm:$0xff]
    %v85 = vld [vmem:[#allocation5 + $0x68] sm:$0xff]
    %v86 = vld [vmem:[#allocation5 + $0x70] sm:$0xff]
    %v87 = vld [vmem:[#allocation5 + $0x78] sm:$0xff]
    %88 = vmatprep.subr.mxu0 0.0
    %89 = vmatpush1.msra.mxu0 %v72
    %90 = vmatprep.subr.mxu0 0.0
    %91 = vmatpush1.msra.mxu0 %v73
    %92 = vmatprep.subr.mxu0 0.0
    %93 = vmatpush1.msra.mxu0 %v74
    %94 = vmatprep.subr.mxu0 0.0
    %95 = vmatpush1.msra.mxu0 %v75
    %96 = vmatprep.subr.mxu0 0.0
    %97 = vmatpush1.msra.mxu0 %v76
    %98 = vmatprep.subr.mxu0 0.0
    %99 = vmatpush1.msra.mxu0 %v77
    %100 = vmatprep.subr.mxu0 0.0
    %101 = vmatpush1.msra.mxu0 %v78
    %102 = vmatprep.subr.mxu0 0.0
    %103 = vmatpush1.msra.mxu0 %v79
    %104 = vmatprep.subr.mxu0 0.0
    %105 = vmatpush1.msra.mxu0 %v80
    %106 = vmatprep.subr.mxu0 0.0
    %107 = vmatpush1.msra.mxu0 %v81
    %108 = vmatprep.subr.mxu0 0.0
    %109 = vmatpush1.msra.mxu0 %v82
    %110 = vmatprep.subr.mxu0 0.0
    %111 = vmatpush1.msra.mxu0 %v83
    %112 = vmatprep.subr.mxu0 0.0
    %113 = vmatpush1.msra.mxu0 %v84
    %114 = vmatprep.subr.mxu0 0.0
    %115 = vmatpush1.msra.mxu0 %v85
    %116 = vmatprep.subr.mxu0 0.0
    %117 = vmatpush1.msra.mxu0 %v86
    %118 = vmatprep.subr.mxu0 0.0
    %119 = vmatpush1.msra.mxu0 %v87
    %120 = vmatprep.subr.mxu0 0.0
    %121 = vmatpush1.msra.mxu0 0.0
    %122 = vmatprep.subr.mxu0 0.0
    %123 = vmatpush1.msra.mxu0 0.0
    %124 = vmatprep.subr.mxu0 0.0
    %125 = vmatpush1.msra.mxu0 0.0
    %126 = vmatprep.subr.mxu0 0.0
    %127 = vmatpush1.msra.mxu0 0.0
    %128 = vmatprep.subr.mxu0 0.0
    %129 = vmatpush1.msra.mxu0 0.0
    %130 = vmatprep.subr.mxu0 0.0
    %131 = vmatpush1.msra.mxu0 0.0
    %132 = vmatprep.subr.mxu0 0.0
    %133 = vmatpush1.msra.mxu0 0.0
    %134 = vmatprep.subr.mxu0 0.0
    %135 = vmatpush1.msra.mxu0 0.0
    %136 = vmatprep.subr.mxu0 0.0
    %137 = vmatpush1.msra.mxu0 0.0
    %138 = vmatprep.subr.mxu0 0.0
    %139 = vmatpush1.msra.mxu0 0.0
    %140 = vmatprep.subr.mxu0 0.0
    %141 = vmatpush1.msra.mxu0 0.0
    %142 = vmatprep.subr.mxu0 0.0
    %143 = vmatpush1.msra.mxu0 0.0
    %144 = vmatprep.subr.mxu0 0.0
    %145 = vmatpush1.msra.mxu0 0.0
    %146 = vmatprep.subr.mxu0 0.0
    %147 = vmatpush1.msra.mxu0 0.0
    %148 = vmatprep.subr.mxu0 0.0
    %149 = vmatpush1.msra.mxu0 0.0
    %150 = vmatprep.subr.mxu0 0.0
    %151 = vmatpush1.msra.mxu0 0.0
    %152 = vmatprep.mubr.f32.mxu0 0.0
    %153 = vmatmul.mubr.f32.gmra.mrb[0].mxu0 %v40
    %v154 = vpop.f32.mrb[0].mxu0
    %v155 = vadd.f32 0.0, %v154
    %v156 = vpop.f32.mrb[0].mxu0
    %157 = vmatprep.mubr.f32.mxu0 0.0
    %158 = vmatmul.mubr.f32.gmra.mrb[0].mxu0 %v41
    %v159 = vpop.f32.mrb[0].mxu0
    %v160 = vadd.f32 0.0, %v159
    %v161 = vpop.f32.mrb[0].mxu0
    %162 = vmatprep.mubr.f32.mxu0 0.0
    %163 = vmatmul.mubr.f32.gmra.mrb[0].mxu0 %v42
    %v164 = vpop.f32.mrb[0].mxu0
    %v165 = vadd.f32 0.0, %v164
    %v166 = vpop.f32.mrb[0].mxu0
    %167 = vmatprep.mubr.f32.mxu0 0.0
    %168 = vmatmul.mubr.f32.gmra.mrb[0].mxu0 %v43
    %v169 = vpop.f32.mrb[0].mxu0
    %v170 = vadd.f32 0.0, %v169
    %v171 = vpop.f32.mrb[0].mxu0
    %172 = vmatprep.mubr.f32.mxu0 0.0
    %173 = vmatmul.mubr.f32.gmra.mrb[0].mxu0 %v44
    %v174 = vpop.f32.mrb[0].mxu0
    %v175 = vadd.f32 0.0, %v174
    %v176 = vpop.f32.mrb[0].mxu0
    %177 = vmatprep.mubr.f32.mxu0 0.0
    %178 = vmatmul.mubr.f32.gmra.mrb[0].mxu0 %v45
    %v179 = vpop.f32.mrb[0].mxu0
    %v180 = vadd.f32 0.0, %v179
    %v181 = vpop.f32.mrb[0].mxu0
    %182 = vmatprep.mubr.f32.mxu0 0.0
    %183 = vmatmul.mubr.f32.gmra.mrb[0].mxu0 %v46
    %v184 = vpop.f32.mrb[0].mxu0
    %v185 = vadd.f32 0.0, %v184
    %v186 = vpop.f32.mrb[0].mxu0
    %187 = vmatprep.mubr.f32.mxu0 0.0
    %188 = vmatmul.mubr.f32.gmra.mrb[0].mxu0 %v47
    %v189 = vpop.f32.mrb[0].mxu0
    %v190 = vadd.f32 0.0, %v189
    %v191 = vpop.f32.mrb[0].mxu0
    %192 = vmatprep.mubr.f32.mxu0 0.0
    %193 = vmatmul.mubr.f32.gmra.mrb[0].mxu0 %v48
    %v194 = vpop.f32.mrb[0].mxu0
    %v195 = vadd.f32 0.0, %v194
    %v196 = vpop.f32.mrb[0].mxu0
    %197 = vmatprep.mubr.f32.mxu0 0.0
    %198 = vmatmul.mubr.f32.gmra.mrb[0].mxu0 %v49
    %v199 = vpop.f32.mrb[0].mxu0
    %v200 = vadd.f32 0.0, %v199
    %v201 = vpop.f32.mrb[0].mxu0
    %202 = vmatprep.mubr.f32.mxu0 0.0
    %203 = vmatmul.mubr.f32.gmra.mrb[0].mxu0 %v50
    %v204 = vpop.f32.mrb[0].mxu0
    %v205 = vadd.f32 0.0, %v204
    %v206 = vpop.f32.mrb[0].mxu0
    %207 = vmatprep.mubr.f32.mxu0 0.0
    %208 = vmatmul.mubr.f32.gmra.mrb[0].mxu0 %v51
    %v209 = vpop.f32.mrb[0].mxu0
    %v210 = vadd.f32 0.0, %v209
    %v211 = vpop.f32.mrb[0].mxu0
    %212 = vmatprep.mubr.f32.mxu0 0.0
    %213 = vmatmul.mubr.f32.gmra.mrb[0].mxu0 %v52
    %v214 = vpop.f32.mrb[0].mxu0
    %v215 = vadd.f32 0.0, %v214
    %v216 = vpop.f32.mrb[0].mxu0
    %217 = vmatprep.mubr.f32.mxu0 0.0
    %218 = vmatmul.mubr.f32.gmra.mrb[0].mxu0 %v53
    %v219 = vpop.f32.mrb[0].mxu0
    %v220 = vadd.f32 0.0, %v219
    %v221 = vpop.f32.mrb[0].mxu0
    %222 = vmatprep.mubr.f32.mxu0 0.0
    %223 = vmatmul.mubr.f32.gmra.mrb[0].mxu0 %v54
    %v224 = vpop.f32.mrb[0].mxu0
    %v225 = vadd.f32 0.0, %v224
    %v226 = vpop.f32.mrb[0].mxu0
    %227 = vmatprep.mubr.f32.mxu0 0.0
    %228 = vmatmul.mubr.f32.gmra.mrb[0].mxu0 %v55
    %v229 = vpop.f32.mrb[0].mxu0
    %v230 = vadd.f32 0.0, %v229
    %v231 = vpop.f32.mrb[0].mxu0
    %232 = vmatprep.mubr.f32.mxu0 0.0
    %233 = vmatmul.mubr.f32.gmra.mrb[0].mxu0 %v56
    %v234 = vpop.f32.mrb[0].mxu0
    %v235 = vadd.f32 0.0, %v234
    %v236 = vpop.f32.mrb[0].mxu0
    %237 = vmatprep.mubr.f32.mxu0 0.0
    %238 = vmatmul.mubr.f32.gmra.mrb[0].mxu0 %v57
    %v239 = vpop.f32.mrb[0].mxu0
    %v240 = vadd.f32 0.0, %v239
    %v241 = vpop.f32.mrb[0].mxu0
    %242 = vmatprep.mubr.f32.mxu0 0.0
    %243 = vmatmul.mubr.f32.gmra.mrb[0].mxu0 %v58
    %v244 = vpop.f32.mrb[0].mxu0
    %v245 = vadd.f32 0.0, %v244
    %v246 = vpop.f32.mrb[0].mxu0
    %247 = vmatprep.mubr.f32.mxu0 0.0
    %248 = vmatmul.mubr.f32.gmra.mrb[0].mxu0 %v59
    %v249 = vpop.f32.mrb[0].mxu0
    %v250 = vadd.f32 0.0, %v249
    %v251 = vpop.f32.mrb[0].mxu0
    %252 = vmatprep.mubr.f32.mxu0 0.0
    %253 = vmatmul.mubr.f32.gmra.mrb[0].mxu0 %v60
    %v254 = vpop.f32.mrb[0].mxu0
    %v255 = vadd.f32 0.0, %v254
    %v256 = vpop.f32.mrb[0].mxu0
    %257 = vmatprep.mubr.f32.mxu0 0.0
    %258 = vmatmul.mubr.f32.gmra.mrb[0].mxu0 %v61
    %v259 = vpop.f32.mrb[0].mxu0
    %v260 = vadd.f32 0.0, %v259
    %v261 = vpop.f32.mrb[0].mxu0
    %262 = vmatprep.mubr.f32.mxu0 0.0
    %263 = vmatmul.mubr.f32.gmra.mrb[0].mxu0 %v62
    %v264 = vpop.f32.mrb[0].mxu0
    %v265 = vadd.f32 0.0, %v264
    %v266 = vpop.f32.mrb[0].mxu0
    %267 = vmatprep.mubr.f32.mxu0 0.0
    %268 = vmatmul.mubr.f32.gmra.mrb[0].mxu0 %v63
    %v269 = vpop.f32.mrb[0].mxu0
    %v270 = vadd.f32 0.0, %v269
    %v271 = vpop.f32.mrb[0].mxu0
    %272 = vmatprep.mubr.f32.mxu0 0.0
    %273 = vmatmul.mubr.f32.gmra.mrb[0].mxu0 %v64
    %v274 = vpop.f32.mrb[0].mxu0
    %v275 = vadd.f32 0.0, %v274
    %v276 = vpop.f32.mrb[0].mxu0
    %277 = vmatprep.mubr.f32.mxu0 0.0
    %278 = vmatmul.mubr.f32.gmra.mrb[0].mxu0 %v65
    %v279 = vpop.f32.mrb[0].mxu0
    %v280 = vadd.f32 0.0, %v279
    %v281 = vpop.f32.mrb[0].mxu0
    %282 = vmatprep.mubr.f32.mxu0 0.0
    %283 = vmatmul.mubr.f32.gmra.mrb[0].mxu0 %v66
    %v284 = vpop.f32.mrb[0].mxu0
    %v285 = vadd.f32 0.0, %v284
    %v286 = vpop.f32.mrb[0].mxu0
    %287 = vmatprep.mubr.f32.mxu0 0.0
    %288 = vmatmul.mubr.f32.gmra.mrb[0].mxu0 %v67
    %v289 = vpop.f32.mrb[0].mxu0
    %v290 = vadd.f32 0.0, %v289
    %v291 = vpop.f32.mrb[0].mxu0
    %292 = vmatprep.mubr.f32.mxu0 0.0
    %293 = vmatmul.mubr.f32.gmra.mrb[0].mxu0 %v68
    %v294 = vpop.f32.mrb[0].mxu0
    %v295 = vadd.f32 0.0, %v294
    %v296 = vpop.f32.mrb[0].mxu0
    %297 = vmatprep.mubr.f32.mxu0 0.0
    %298 = vmatmul.mubr.f32.gmra.mrb[0].mxu0 %v69
    %v299 = vpop.f32.mrb[0].mxu0
    %v300 = vadd.f32 0.0, %v299
    %v301 = vpop.f32.mrb[0].mxu0
    %302 = vmatprep.mubr.f32.mxu0 0.0
    %303 = vmatmul.mubr.f32.gmra.mrb[0].mxu0 %v70
    %v304 = vpop.f32.mrb[0].mxu0
    %v305 = vadd.f32 0.0, %v304
    %v306 = vpop.f32.mrb[0].mxu0
    %307 = vmatprep.mubr.f32.mxu0 0.0
    %308 = vmatmul.mubr.f32.gmra.mrb[0].mxu0 %v71
    %v309 = vpop.f32.mrb[0].mxu0
    %v310 = vadd.f32 0.0, %v309
    %v311 = vpop.f32.mrb[0].mxu0
    %312 = vdwg.mxu0
    %v313 = vpack.c.bf16 %v160, %v155
    %v314 = vpack.c.bf16 %v170, %v165
    %v315 = vpack.c.bf16 %v180, %v175
    %v316 = vpack.c.bf16 %v190, %v185
    %v317 = vpack.c.bf16 %v200, %v195
    %v318 = vpack.c.bf16 %v210, %v205
    %v319 = vpack.c.bf16 %v220, %v215
    %v320 = vpack.c.bf16 %v230, %v225
    %v321 = vpack.c.bf16 %v240, %v235
    %v322 = vpack.c.bf16 %v250, %v245
    %v323 = vpack.c.bf16 %v260, %v255
    %v324 = vpack.c.bf16 %v270, %v265
    %v325 = vpack.c.bf16 %v280, %v275
    %v326 = vpack.c.bf16 %v290, %v285
    %v327 = vpack.c.bf16 %v300, %v295
    %v328 = vpack.c.bf16 %v310, %v305
    %v345 = vunpack.c.l.b16 %v313
    %v346 = vunpack.c.h.b16 %v313
    %v347 = vunpack.c.l.b16 %v314
    %v348 = vunpack.c.h.b16 %v314
    %v349 = vunpack.c.l.b16 %v315
    %v350 = vunpack.c.h.b16 %v315
    %v351 = vunpack.c.l.b16 %v316
    %v352 = vunpack.c.h.b16 %v316
    %v353 = vunpack.c.l.b16 %v317
    %v354 = vunpack.c.h.b16 %v317
    %v355 = vunpack.c.l.b16 %v318
    %v356 = vunpack.c.h.b16 %v318
    %v357 = vunpack.c.l.b16 %v319
    %v358 = vunpack.c.h.b16 %v319
    %v359 = vunpack.c.l.b16 %v320
    %v360 = vunpack.c.h.b16 %v320
    %v361 = vunpack.c.l.b16 %v321
    %v362 = vunpack.c.h.b16 %v321
    %v363 = vunpack.c.l.b16 %v322
    %v364 = vunpack.c.h.b16 %v322
    %v365 = vunpack.c.l.b16 %v323
    %v366 = vunpack.c.h.b16 %v323
    %v367 = vunpack.c.l.b16 %v324
    %v368 = vunpack.c.h.b16 %v324
    %v369 = vunpack.c.l.b16 %v325
    %v370 = vunpack.c.h.b16 %v325
    %v371 = vunpack.c.l.b16 %v326
    %v372 = vunpack.c.h.b16 %v326
    %v373 = vunpack.c.l.b16 %v327
    %v374 = vunpack.c.h.b16 %v327
    %v375 = vunpack.c.l.b16 %v328
    %v376 = vunpack.c.h.b16 %v328
    %v377 = vpack.c.b16 %v345, %v345
    %v378 = vpack.c.b16 %v346, %v346
    %v379 = vpack.c.b16 %v347, %v347
    %v380 = vpack.c.b16 %v348, %v348
    %v381 = vpack.c.b16 %v349, %v349
    %v382 = vpack.c.b16 %v350, %v350
    %v383 = vpack.c.b16 %v351, %v351
    %v384 = vpack.c.b16 %v352, %v352
    %v385 = vpack.c.b16 %v353, %v353
    %v386 = vpack.c.b16 %v354, %v354
    %v387 = vpack.c.b16 %v355, %v355
    %v388 = vpack.c.b16 %v356, %v356
    %v389 = vpack.c.b16 %v357, %v357
    %v390 = vpack.c.b16 %v358, %v358
    %v391 = vpack.c.b16 %v359, %v359
    %v392 = vpack.c.b16 %v360, %v360
    %v393 = vpack.c.b16 %v361, %v361
    %v394 = vpack.c.b16 %v362, %v362
    %v395 = vpack.c.b16 %v363, %v363
    %v396 = vpack.c.b16 %v364, %v364
    %v397 = vpack.c.b16 %v365, %v365
    %v398 = vpack.c.b16 %v366, %v366
    %v399 = vpack.c.b16 %v367, %v367
    %v400 = vpack.c.b16 %v368, %v368
    %v401 = vpack.c.b16 %v369, %v369
    %v402 = vpack.c.b16 %v370, %v370
    %v403 = vpack.c.b16 %v371, %v371
    %v404 = vpack.c.b16 %v372, %v372
    %v405 = vpack.c.b16 %v373, %v373
    %v406 = vpack.c.b16 %v374, %v374
    %v407 = vpack.c.b16 %v375, %v375
    %v408 = vpack.c.b16 %v376, %v376
    %441 = vst [vmem:[#allocation7] sm:$0xf] %v377
    %442 = vst [vmem:[#allocation7 + $0x4] sm:$0xf] %v378
    %443 = vst [vmem:[#allocation7 + $0x8] sm:$0xf] %v379
    %444 = vst [vmem:[#allocation7 + $0xc] sm:$0xf] %v380
    %445 = vst [vmem:[#allocation7 + $0x10] sm:$0xf] %v381
    %446 = vst [vmem:[#allocation7 + $0x14] sm:$0xf] %v382
    %447 = vst [vmem:[#allocation7 + $0x18] sm:$0xf] %v383
    %448 = vst [vmem:[#allocation7 + $0x1c] sm:$0xf] %v384
    %449 = vst [vmem:[#allocation7 + $0x20] sm:$0xf] %v385
    %450 = vst [vmem:[#allocation7 + $0x24] sm:$0xf] %v386
    %451 = vst [vmem:[#allocation7 + $0x28] sm:$0xf] %v387
    %452 = vst [vmem:[#allocation7 + $0x2c] sm:$0xf] %v388
    %453 = vst [vmem:[#allocation7 + $0x30] sm:$0xf] %v389
    %454 = vst [vmem:[#allocation7 + $0x34] sm:$0xf] %v390
    %455 = vst [vmem:[#allocation7 + $0x38] sm:$0xf] %v391
    %456 = vst [vmem:[#allocation7 + $0x3c] sm:$0xf] %v392
    %457 = vst [vmem:[#allocation7 + $0x40] sm:$0xf] %v393
    %458 = vst [vmem:[#allocation7 + $0x44] sm:$0xf] %v394
    %459 = vst [vmem:[#allocation7 + $0x48] sm:$0xf] %v395
    %460 = vst [vmem:[#allocation7 + $0x4c] sm:$0xf] %v396
    %461 = vst [vmem:[#allocation7 + $0x50] sm:$0xf] %v397
    %462 = vst [vmem:[#allocation7 + $0x54] sm:$0xf] %v398
    %463 = vst [vmem:[#allocation7 + $0x58] sm:$0xf] %v399
    %464 = vst [vmem:[#allocation7 + $0x5c] sm:$0xf] %v400
    %465 = vst [vmem:[#allocation7 + $0x60] sm:$0xf] %v401
    %466 = vst [vmem:[#allocation7 + $0x64] sm:$0xf] %v402
    %467 = vst [vmem:[#allocation7 + $0x68] sm:$0xf] %v403
    %468 = vst [vmem:[#allocation7 + $0x6c] sm:$0xf] %v404
    %469 = vst [vmem:[#allocation7 + $0x70] sm:$0xf] %v405
    %470 = vst [vmem:[#allocation7 + $0x74] sm:$0xf] %v406
    %471 = vst [vmem:[#allocation7 + $0x78] sm:$0xf] %v407
    %472 = vst [vmem:[#allocation7 + $0x7c] sm:$0xf] %v408
    // Predicated region
    $region18: #{tpu_custom_call.1} parent=1 // pred_check
      _
    $region19: #{tpu_custom_call.1} parent=1 // pred_check_branch
      %474 = sbr.rel (0) target = $region21
    $region20: #{tpu_custom_call.1} parent=1 // pred_region
      %s476 = ssub.s32 2048, 2048
      %477 = vsyncadd [#allocation4], %s476
      %s478 = sshll.u32 [#allocation7], 4
      %s479 = int_to_ptr.vmem [resolvable:$true] %s478
      %484 = dma.vmem_to_hbm [thread:$0]  %s479, 2048, %s2, [#allocation4], 64, 64, 4
    $region21: #{tpu_custom_call.1} parent=1 // pred_fallthru
      _
    // Predicated region
    $region22: #{tpu_custom_call.1} parent=1 // pred_check
      _
    $region23: #{tpu_custom_call.1} parent=1 // pred_check_branch
      %486 = sbr.rel (0) target = $region25
    $region24: #{tpu_custom_call.1} parent=1 // pred_region
      %487 = dma.done [#allocation4], 2048
    $region25: #{tpu_custom_call.1} parent=1 // pred_fallthru
      _
    %488 = vsyncpa [#allocation3], 1
    %489 = vsyncpa [#allocation6], 1
    %490 = vsyncpa [#allocation4], 1

</llo_original>
